<compile_context>
chip_gen: v7x
topology: tpu7x:2x2x1
jax: 0.10.0
libtpu: 0.0.40
codegen_flags: <defaults>
</compile_context>

<pallas_src>
import functools

import jax
import jax.numpy as jnp
from jax.experimental import pallas as pl
from jax.experimental.pallas import tpu as pltpu


def _make_focal_kernel(*, gamma, inv_n, n_valid, tile_n, has_weight):
    """Builds the kernel body; weight handling & gamma are compile-time choices."""

    def kernel(*refs):
        if has_weight:
            y_ref, logits_ref, w_ref, out_ref, acc_ref = refs
        else:
            y_ref, logits_ref, out_ref, acc_ref = refs
            w_ref = None

        i = pl.program_id(0)

        @pl.when(i == 0)
        def _():
            acc_ref[...] = jnp.zeros_like(acc_ref)

        logits = logits_ref[...].astype(jnp.float32)        # (C, TN) class on sublanes
        y = y_ref[...]                                       # (1, TN) int32

        # Numerically stable log-sum-exp along the class (sublane) axis.
        m = jnp.max(logits, axis=0, keepdims=True)           # (1, TN)
        lse = m + jnp.log(jnp.sum(jnp.exp(logits - m), axis=0, keepdims=True))

        # One-hot gather of the true-class logit (and weight, if present).
        class_ids = jax.lax.broadcasted_iota(jnp.int32, logits.shape, 0)  # (C, TN)
        onehot = class_ids == y                                           # (C, TN)
        logit_y = jnp.sum(jnp.where(onehot, logits, 0.0), axis=0, keepdims=True)  # (1, TN)

        ce = lse - logit_y                                   # unweighted CE per sample
        if has_weight:
            w = w_ref[...].astype(jnp.float32)               # (C, 1)
            w_y = jnp.sum(jnp.where(onehot, w, 0.0), axis=0, keepdims=True)  # (1, TN)
            ce = w_y * ce

        prob = jnp.exp(logit_y - lse)                        # softmax prob of true class
        one_minus_p = 1.0 - prob

        # gamma specialization: keep the modulating factor on the VPU when possible.
        if gamma == 2.0:
            mod = one_minus_p * one_minus_p
        elif float(gamma).is_integer() and gamma >= 0.0:
            g = int(gamma)
            mod = jnp.ones_like(one_minus_p)
            for _ in range(g):
                mod = mod * one_minus_p
        else:
            mod = one_minus_p ** gamma                       # EUP fallback (non-integer gamma)

        focal = mod * ce                                     # (1, TN)

        # Mask out padded tail columns.
        col = i * tile_n + jax.lax.broadcasted_iota(jnp.int32, focal.shape, 1)
        focal = jnp.where(col < n_valid, focal, 0.0)

        # Per-tile scalar reduce into the (1,1) accumulator.
        acc_ref[...] += jnp.sum(focal, keepdims=True)

        @pl.when(i == pl.num_programs(0) - 1)
        def _():
            out_ref[...] = acc_ref[...] * inv_n

    return kernel


def focal_loss(y_pred, y_true, weight=None, gamma=2.0, *, tile_n=512):
    """y_pred: (N, C) float logits. y_true: (N,) int class indices. Returns scalar f32."""
    n, c = y_pred.shape

    # Tile size: multiple of 128 lanes, no larger than N rounded up to 128.
    tile_n = pl.cdiv(int(tile_n), 128) * 128
    tile_n = max(128, min(tile_n, pl.cdiv(n, 128) * 128))
    n_pad = pl.cdiv(n, tile_n) * tile_n

    # Lane-dense layout: samples on lanes, classes on sublanes.
    logits_t = jnp.transpose(y_pred.astype(jnp.float32))     # (C, N)
    y2d = y_true.astype(jnp.int32).reshape(1, n)             # (1, N)
    if n_pad != n:
        logits_t = jnp.pad(logits_t, ((0, 0), (0, n_pad - n)))
        y2d = jnp.pad(y2d, ((0, 0), (0, n_pad - n)))

    has_weight = weight is not None
    inputs = [y2d, logits_t]
    in_specs = [
        pl.BlockSpec((1, tile_n), lambda i: (0, i)),         # y_true
        pl.BlockSpec((c, tile_n), lambda i: (0, i)),         # logits (C, TN)
    ]
    if has_weight:
        inputs.append(weight.astype(jnp.float32).reshape(c, 1))
        in_specs.append(pl.BlockSpec((c, 1), lambda i: (0, 0)))

    kernel = _make_focal_kernel(
        gamma=float(gamma), inv_n=1.0 / float(n), n_valid=int(n),
        tile_n=int(tile_n), has_weight=has_weight)

    out = pl.pallas_call(
        kernel,
        out_shape=jax.ShapeDtypeStruct((1, 1), jnp.float32),
        grid_spec=pltpu.PrefetchScalarGridSpec(
            num_scalar_prefetch=0,
            grid=(n_pad // tile_n,),
            in_specs=in_specs,
            out_specs=pl.BlockSpec((1, 1), lambda i: (0, 0)),
            scratch_shapes=[pltpu.VMEM((1, 1), jnp.float32)],
        ),
        compiler_params=pltpu.CompilerParams(
            dimension_semantics=("arbitrary",),  # grid axis is a reduction
        ),
    )(*inputs)
    return out[0, 0]


def _focal_loss_ref(y_pred, y_true, weight, gamma):
    logits = y_pred.astype(jnp.float32)
    lse = jax.scipy.special.logsumexp(logits, axis=1)
    logit_y = jnp.take_along_axis(logits, y_true[:, None], axis=1)[:, 0]
    w_y = 1.0 if weight is None else weight[y_true]
    ce = w_y * (lse - logit_y)
    prob = jnp.exp(logit_y - lse)
    return jnp.mean((1.0 - prob) ** gamma * ce)


if __name__ == "__main__":
    key = jax.random.PRNGKey(0)
    k1, k2, k3 = jax.random.split(key, 3)

    N, C = 128, 16
    gamma = 2.0
    y_pred = jax.random.normal(k1, (N, C), dtype=jnp.float32)
    y_true = jax.random.randint(k2, (N,), 0, C, dtype=jnp.int32)

    # Default path: weight=None (specialized kernel, no weight stream).
    loss = focal_loss(y_pred, y_true, weight=None, gamma=gamma)
    loss = jax.block_until_ready(loss)
    ref = _focal_loss_ref(y_pred, y_true, None, gamma)
    assert jnp.allclose(loss, ref, rtol=1e-5, atol=1e-6), (loss, ref)

    # Weighted path (matches: per-sample weighted CE, reduction='none', then plain mean).
    weight = jax.random.uniform(k3, (C,), dtype=jnp.float32, minval=0.5, maxval=1.5)
    loss_w = focal_loss(y_pred, y_true, weight=weight, gamma=gamma)
    loss_w = jax.block_until_ready(loss_w)
    ref_w = _focal_loss_ref(y_pred, y_true, weight, gamma)
    assert jnp.allclose(loss_w, ref_w, rtol=1e-5, atol=1e-6), (loss_w, ref_w)

    print("KERNEL_OK")
</pallas_src>

<mosaic_0001>
module attributes {stable_mosaic.version = 11 : i64} {
  func.func @kernel(%arg0: i32, %arg1: memref<1x128xi32, #tpu.memory_space<vmem>>, %arg2: memref<16x128xf32, #tpu.memory_space<vmem>>, %arg3: memref<1x1xf32, #tpu.memory_space<vmem>>, %arg4: memref<1x1xf32, #tpu.memory_space<vmem>>) attributes {dimension_semantics = [#tpu.dimension_semantics<arbitrary>], iteration_bounds = array<i64: 1>, scalar_prefetch = 0 : i64, scratch_operands = 1 : i64, tpu.core_type = #tpu.core_type<tc>, window_params = [{transform_indices = @transform_0, window_bounds = array<i64: 1, 128>}, {transform_indices = @transform_1, window_bounds = array<i64: 16, 128>}, {pipeline_mode = #tpu.pipeline_mode<synchronous>, transform_indices = @transform_2, window_bounds = array<i64: 1, 1>}]} {
    %c0_i32 = arith.constant 0 : i32
    %0 = arith.cmpi eq, %arg0, %c0_i32 : i32
    %1 = arith.extui %0 : i1 to i32
    %c0_i32_0 = arith.constant 0 : i32
    %2 = arith.cmpi ne, %1, %c0_i32_0 : i32
    scf.if %2 {
      %cst_17 = arith.constant 0.000000e+00 : f32
      %47 = vector.broadcast %cst_17 : f32 to vector<1x1xf32>
      %c0_18 = arith.constant 0 : index
      %c0_19 = arith.constant 0 : index
      %48 = vector.load %arg4[%c0_18, %c0_19] : memref<1x1xf32, #tpu.memory_space<vmem>>, vector<1x1xf32>
      tpu.vector_store %arg4[%c0_18, %c0_19], %47 {strides = array<i32>} : memref<1x1xf32, #tpu.memory_space<vmem>>, vector<1x1xf32>,
    } else {
    }
    %c0 = arith.constant 0 : index
    %c0_1 = arith.constant 0 : index
    %3 = vector.load %arg2[%c0, %c0_1] : memref<16x128xf32, #tpu.memory_space<vmem>>, vector<16x128xf32>
    %c0_2 = arith.constant 0 : index
    %c0_3 = arith.constant 0 : index
    %4 = vector.load %arg1[%c0_2, %c0_3] : memref<1x128xi32, #tpu.memory_space<vmem>>, vector<1x128xi32>
    %cst = arith.constant dense<0xFF800000> : vector<128xf32>
    %5 = vector.multi_reduction <maximumf>, %3, %cst [0] : vector<16x128xf32> to vector<128xf32>
    %6 = vector.shape_cast %5 : vector<128xf32> to vector<1x128xf32>
    %7 = vector.broadcast %6 : vector<1x128xf32> to vector<16x128xf32>
    %8 = arith.subf %3, %7 : vector<16x128xf32>
    %9 = math.exp %8 : vector<16x128xf32>
    %cst_4 = arith.constant dense<0.000000e+00> : vector<128xf32>
    %10 = vector.multi_reduction <add>, %9, %cst_4 [0] : vector<16x128xf32> to vector<128xf32>
    %11 = vector.shape_cast %10 : vector<128xf32> to vector<1x128xf32>
    %12 = math.log %11 : vector<1x128xf32>
    %13 = arith.addf %6, %12 : vector<1x128xf32>
    %14 = tpu.iota {dimensions = array<i32: 0>} : vector<16x128xi32>
    %15 = vector.broadcast %4 : vector<1x128xi32> to vector<16x128xi32>
    %16 = arith.cmpi eq, %14, %15 : vector<16x128xi32>
    %cst_5 = arith.constant 0.000000e+00 : f32
    %17 = vector.broadcast %cst_5 : f32 to vector<16x128xf32>
    %18 = arith.select %16, %3, %17 : vector<16x128xi1>, vector<16x128xf32>
    %cst_6 = arith.constant dense<0.000000e+00> : vector<128xf32>
    %19 = vector.multi_reduction <add>, %18, %cst_6 [0] : vector<16x128xf32> to vector<128xf32>
    %20 = vector.shape_cast %19 : vector<128xf32> to vector<1x128xf32>
    %21 = arith.subf %13, %20 : vector<1x128xf32>
    %22 = arith.subf %20, %13 : vector<1x128xf32>
    %23 = math.exp %22 : vector<1x128xf32>
    %cst_7 = arith.constant 1.000000e+00 : f32
    %24 = vector.broadcast %cst_7 : f32 to vector<1x128xf32>
    %25 = arith.subf %24, %23 : vector<1x128xf32>
    %26 = arith.mulf %25, %25 : vector<1x128xf32>
    %27 = arith.mulf %26, %21 : vector<1x128xf32>
    %c128_i32 = arith.constant 128 : i32
    %28 = arith.muli %arg0, %c128_i32 : i32
    %29 = tpu.iota {dimensions = array<i32: 1>} : vector<1x128xi32>
    %30 = vector.broadcast %28 : i32 to vector<1x128xi32>
    %31 = arith.addi %30, %29 : vector<1x128xi32>
    %c128_i32_8 = arith.constant 128 : i32
    %32 = vector.broadcast %c128_i32_8 : i32 to vector<1x128xi32>
    %33 = arith.cmpi slt, %31, %32 : vector<1x128xi32>
    %cst_9 = arith.constant 0.000000e+00 : f32
    %34 = vector.broadcast %cst_9 : f32 to vector<1x128xf32>
    %35 = arith.select %33, %27, %34 : vector<1x128xi1>, vector<1x128xf32>
    %c0_10 = arith.constant 0 : index
    %c0_11 = arith.constant 0 : index
    %36 = vector.load %arg4[%c0_10, %c0_11] : memref<1x1xf32, #tpu.memory_space<vmem>>, vector<1x1xf32>
    %37 = vector.shape_cast %35 : vector<1x128xf32> to vector<1x1x128xf32>
    %cst_12 = arith.constant dense<0.000000e+00> : vector<1xf32>
    %38 = vector.multi_reduction <add>, %37, %cst_12 [1, 2] : vector<1x1x128xf32> to vector<1xf32>
    %39 = vector.shape_cast %38 : vector<1xf32> to vector<1x1x1xf32>
    %40 = vector.extract %39[0, 0, 0] : f32 from vector<1x1x1xf32>
    %41 = vector.broadcast %40 : f32 to vector<1x1xf32>
    %42 = arith.addf %36, %41 : vector<1x1xf32>
    %c0_13 = arith.constant 0 : index
    %c0_14 = arith.constant 0 : index
    %43 = vector.load %arg4[%c0_13, %c0_14] : memref<1x1xf32, #tpu.memory_space<vmem>>, vector<1x1xf32>
    tpu.vector_store %arg4[%c0_13, %c0_14], %42 {strides = array<i32>} : memref<1x1xf32, #tpu.memory_space<vmem>>, vector<1x1xf32>,
    %c0_i32_15 = arith.constant 0 : i32
    %44 = arith.cmpi eq, %arg0, %c0_i32_15 : i32
    %45 = arith.extui %44 : i1 to i32
    %c0_i32_16 = arith.constant 0 : i32
    %46 = arith.cmpi ne, %45, %c0_i32_16 : i32
    scf.if %46 {
      %c0_17 = arith.constant 0 : index
      %c0_18 = arith.constant 0 : index
      %47 = vector.load %arg4[%c0_17, %c0_18] : memref<1x1xf32, #tpu.memory_space<vmem>>, vector<1x1xf32>
      %cst_19 = arith.constant 7.812500e-03 : f32
      %48 = vector.broadcast %cst_19 : f32 to vector<1x1xf32>
      %49 = arith.mulf %47, %48 : vector<1x1xf32>
      %c0_20 = arith.constant 0 : index
      %c0_21 = arith.constant 0 : index
      %50 = vector.load %arg3[%c0_20, %c0_21] : memref<1x1xf32, #tpu.memory_space<vmem>>, vector<1x1xf32>
      tpu.vector_store %arg3[%c0_20, %c0_21], %49 {strides = array<i32>} : memref<1x1xf32, #tpu.memory_space<vmem>>, vector<1x1xf32>,
    } else {
    }
    return
  }
  func.func @transform_0(%arg0: i32) -> (i32, i32) {
    %c0_i32 = arith.constant 0 : i32
    %c0_i32_0 = arith.constant 0 : i32
    return %c0_i32, %arg0 : i32, i32
  }
  func.func @transform_1(%arg0: i32) -> (i32, i32) {
    %c0_i32 = arith.constant 0 : i32
    %c0_i32_0 = arith.constant 0 : i32
    return %c0_i32, %arg0 : i32, i32
  }
  func.func @transform_2(%arg0: i32) -> (i32, i32) {
    %c0_i32 = arith.constant 0 : i32
    %c0_i32_0 = arith.constant 0 : i32
    %c0_i32_1 = arith.constant 0 : i32
    return %c0_i32, %c0_i32_0 : i32, i32
  }
}

</mosaic_0001>

<llo_original>
// kernel: tpu_custom_call.1
$region0: #{tpu_custom_call.1}
  #allocation0 [shape = 'u32[]', space=smem, size = 0x4, offset = 0x4, fixed_abs, tag = 'smem constant byte address 0x4 - core index']
  #allocation1 [shape = 'u32[144,128]{1,0:T(1,128)}', space=vmem, size = 0x12000, scoped, tag = 'internal scratch']
  #allocation2 [shape = 'f32[1,1]{1,0:T(1,128)}', space=vmem, size = 0x200, scoped, tag = 'scratch operand']
  %s0 = inlined_call_operand.hbm [shape: s32[1,128], index: 0, kind: input, shape index: {}]
  %s1 = inlined_call_operand.hbm [shape: f32[16,128], index: 1, kind: input, shape index: {}]
  %s2 = inlined_call_operand.hbm [shape: f32[1,1], index: 2, kind: output, shape index: {}]
  %s3 = sld [smem:[#allocation0]]
  $region34: #{tpu_custom_call.1} parent=0
    _
  %s5 = ssub.s32 1, %s3
  %s6 = scalar_select 0, %s5, %s3
  $region1: #{tpu_custom_call.1} parent=0
    #allocation3 [shape = 'u8[512]{0}', space=vmem, size = 0x400, scoped, tag = 'input window, operand 0, single buffered']
    #allocation4 [shape = 's32[1]{0}', space=sflag, size = 0x4, scoped, tag = 'scoped memory for tpu_custom_call.1']
    #allocation5 [shape = 's32[1]{0}', space=sflag, size = 0x4, scoped, tag = 'scoped memory for tpu_custom_call.1']
    #allocation6 [shape = 'u8[8192]{0}', space=vmem, size = 0x2000, scoped, tag = 'input window, operand 1, single buffered']
    #allocation7 [shape = 's32[1]{0}', space=sflag, size = 0x4, scoped, tag = 'scoped memory for tpu_custom_call.1']
    #allocation8 [shape = 'u8[512]{0}', space=vmem, size = 0x400, scoped, tag = 'output window, operand 0, single buffered']
    %7 = vsyncpa [#allocation4], 0
    %8 = vsyncpa [#allocation7], 0
    %9 = vsyncpa [#allocation5], 0
    // Predicated region
    $region2: #{tpu_custom_call.1} parent=1 // pred_check
      _
    $region3: #{tpu_custom_call.1} parent=1 // pred_check_branch
      %11 = sbr.rel (0) target = $region5
    $region4: #{tpu_custom_call.1} parent=1 // pred_region
      %s13 = ssub.s32 16, 16
      %14 = vsyncadd [#allocation4], %s13
      %s16 = sshll.u32 [#allocation3], 4
      %s17 = int_to_ptr.vmem [resolvable:$true] %s16
      %19 = dma.hbm_to_vmem [thread:$0]  %s0, 16, %s17, [#allocation4]
    $region5: #{tpu_custom_call.1} parent=1 // pred_fallthru
      _
    // Predicated region
    $region6: #{tpu_custom_call.1} parent=1 // pred_check
      _
    $region7: #{tpu_custom_call.1} parent=1 // pred_check_branch
      %21 = sbr.rel (0) target = $region9
    $region8: #{tpu_custom_call.1} parent=1 // pred_region
      %s23 = ssub.s32 256, 256
      %24 = vsyncadd [#allocation7], %s23
      %s25 = sshll.u32 [#allocation6], 4
      %s26 = int_to_ptr.vmem [resolvable:$true] %s25
      %31 = dma.hbm_to_vmem [thread:$0]  %s1, 256, %s26, [#allocation7], 128, 128, 8
    $region9: #{tpu_custom_call.1} parent=1 // pred_fallthru
      _
    // Predicated region
    $region10: #{tpu_custom_call.1} parent=1 // pred_check
      _
    $region11: #{tpu_custom_call.1} parent=1 // pred_check_branch
      %33 = sbr.rel (0) target = $region13
    $region12: #{tpu_custom_call.1} parent=1 // pred_region
      %34 = dma.done [#allocation4], 16
    $region13: #{tpu_custom_call.1} parent=1 // pred_fallthru
      _
    // Predicated region
    $region14: #{tpu_custom_call.1} parent=1 // pred_check
      _
    $region15: #{tpu_custom_call.1} parent=1 // pred_check_branch
      %36 = sbr.rel (0) target = $region17
    $region16: #{tpu_custom_call.1} parent=1 // pred_region
      %37 = dma.done [#allocation7], 256
    $region17: #{tpu_custom_call.1} parent=1 // pred_fallthru
      _
    %p38 = scmp.eq.s32.totalorder 0, 0
    // Predicated region
    $region18: #{tpu_custom_call.1} parent=1 // pred_check
      %p39 = pneg %p38
    $region19: #{tpu_custom_call.1} parent=1 // pred_check_branch
      %41 = sbr.rel (%p39) target = $region21
    $region20: #{tpu_custom_call.1} parent=1 // pred_region
      %vm42 = vcmask 0
      %43 = vst.msk [vmem:[#allocation2] sm:$0x1] %vm42, 0.0
    $region21: #{tpu_custom_call.1} parent=1 // pred_fallthru
      _
    %v44 = vld [vmem:[#allocation6] sm:$0xff]
    %v45 = vld [vmem:[#allocation6 + $0x8] sm:$0xff]
    %v46 = vld [vmem:[#allocation3] sm:$0x1]
    %v47 = vmax.f32 %v44, %v45
    %v48 = vrot.slane %v47, 4
    %v49 = vmax.f32 %v47, %v48
    %v50 = vrot.slane %v49, 2
    %v51 = vmax.f32 %v49, %v50
    %v52 = vrot.slane %v51, 1
    %v53 = vmax.f32 %v51, %v52
    %v54 = vsub.f32 %v44, %v53
    %v55 = vsub.f32 %v45, %v53
    %v56 = vmul.f32 %v54, 1.442695
    %v57 = vpow.pop %v56
    %v58 = vmul.f32 %v55, 1.442695
    %v59 = vpow.pop %v58
    %v60 = vadd.f32 %v57, %v59
    %v61 = vrot.slane %v60, 4
    %v62 = vadd.f32 %v60, %v61
    %v63 = vrot.slane %v62, 2
    %v64 = vadd.f32 %v62, %v63
    %v65 = vrot.slane %v64, 1
    %v66 = vadd.f32 %v64, %v65
    %v67 = vlog2.pop %v66
    %v68 = vmul.f32 %v67, 0.6931472
    %v69 = vadd.f32 %v53, %v68
    %v70 = vlaneseq
    %v71 = vshrl.u32 %v70, 7
    %v72 = vadd.s32 %v71, 8
    %v73 = vlaneseq
    %v74 = vshrl.u32 %v73, 7
    %v75 = vsub.s32 0, %v74
    %v76 = vrot.slane %v46, %v75
    %vm77 = vcmp.eq.s32.totalorder %v71, %v76
    %vm78 = vcmp.eq.s32.totalorder %v72, %v76
    %v79 = vsel %vm77, %v44, 0.0
    %v80 = vsel %vm78, %v45, 0.0
    %v81 = vadd.f32 %v79, %v80
    %v82 = vrot.slane %v81, 4
    %v83 = vadd.f32 %v81, %v82
    %v84 = vrot.slane %v83, 2
    %v85 = vadd.f32 %v83, %v84
    %v86 = vrot.slane %v85, 1
    %v87 = vadd.f32 %v85, %v86
    %v88 = vsub.f32 %v69, %v87
    %v89 = vsub.f32 %v87, %v69
    %v90 = vmul.f32 %v89, 1.442695
    %v91 = vpow.pop %v90
    %v92 = vsub.f32 1.0, %v91
    %v93 = vmul.f32 %v92, %v92
    %v94 = vmul.f32 %v93, %v88
    %s95 = smul.u32 0, 128
    %v96 = vlaneseq
    %v97 = vand.u32 %v96, 127
    %v98 = vstv %s95
    %v99 = vadd.s32 %v98, %v97
    %vm100 = vcmp.lt.s32.totalorder %v99, 128
    %v101 = vsel %vm100, %v94, 0.0
    %v102 = vld [vmem:[#allocation2] sm:$0x1]
    %vm103 = vcmask 1040384
    %v104 = vsel %vm103, %v101, 0.0
    %105 = vadd.xlane.f32.xlu0 %v104
    %v106 = vpop.xlane.xlu0 %105
    %v107 = vrot.slane %v106, 4
    %v108 = vadd.f32 %v106, %v107
    %v109 = vrot.slane %v108, 2
    %v110 = vadd.f32 %v108, %v109
    %v111 = vrot.slane %v110, 1
    %v112 = vadd.f32 %v110, %v111
    %s113 = vtos %v112
    %v114 = vstv %s113
    %v115 = vadd.f32 %v102, %v114
    %vm116 = vcmask 0
    %117 = vst.msk [vmem:[#allocation2] sm:$0x1] %vm116, %v115
    // Predicated region
    $region22: #{tpu_custom_call.1} parent=1 // pred_check
      %p118 = pneg %p38
    $region23: #{tpu_custom_call.1} parent=1 // pred_check_branch
      %120 = sbr.rel (%p118) target = $region25
    $region24: #{tpu_custom_call.1} parent=1 // pred_region
      %v121 = vld [vmem:[#allocation2] sm:$0x1]
      %v122 = vmul.f32 %v121, 0.0078125
      %123 = vst.msk [vmem:[#allocation8] sm:$0x1] %vm116, %v122
    $region25: #{tpu_custom_call.1} parent=1 // pred_fallthru
      _
    // Predicated region
    $region26: #{tpu_custom_call.1} parent=1 // pred_check
      _
    $region27: #{tpu_custom_call.1} parent=1 // pred_check_branch
      %125 = sbr.rel (0) target = $region29
    $region28: #{tpu_custom_call.1} parent=1 // pred_region
      %s127 = ssub.s32 16, 16
      %128 = vsyncadd [#allocation5], %s127
      %s130 = sshll.u32 [#allocation8], 4
      %s131 = int_to_ptr.vmem [resolvable:$true] %s130
      %133 = dma.vmem_to_hbm [thread:$0]  %s131, 16, %s2, [#allocation5]
    $region29: #{tpu_custom_call.1} parent=1 // pred_fallthru
      _
    // Predicated region
    $region30: #{tpu_custom_call.1} parent=1 // pred_check
      _
    $region31: #{tpu_custom_call.1} parent=1 // pred_check_branch
      %135 = sbr.rel (0) target = $region33
    $region32: #{tpu_custom_call.1} parent=1 // pred_region
      %136 = dma.done [#allocation5], 16
    $region33: #{tpu_custom_call.1} parent=1 // pred_fallthru
      _
    %137 = vsyncpa [#allocation4], 1
    %138 = vsyncpa [#allocation7], 1
    %139 = vsyncpa [#allocation5], 1

</llo_original>
